<compile_context>
chip_gen: v6e
topology: v6e:2x2x1
jax: 0.10.0
libtpu: 0.0.40
codegen_flags: <defaults>
</compile_context>

<pallas_src>
import jax
import jax.numpy as jnp
from jax.experimental import pallas as pl
from jax.experimental.pallas import tpu as pltpu


def _round_up(x, m):
    return ((x + m - 1) // m) * m


def _decoder_kernel(z_ref, lib_ref, w1_ref, b1_ref, wh_ref, bh_ref,
                    rate_ref, theta_ref, h_ref):
    tO = rate_ref.shape[-1]

    # Stage 1: hidden layer, computed once per B-tile (the O-tile axis is the
    # innermost grid axis). Bias/relu in f32 (v5e-safe), stored bf16 for MXU.
    @pl.when(pl.program_id(1) == 0)
    def _():
        h = jnp.dot(z_ref[...], w1_ref[...], preferred_element_type=jnp.float32)
        h = jnp.maximum(h + b1_ref[...], 0.0)
        h_ref[...] = h.astype(h_ref.dtype)

    # Stage 2: both heads as a single fused matmul over the interleaved
    # [scale_tile | theta_tile] weight slab -> lane-dense (tB, 2*tO) result.
    st = jnp.dot(h_ref[...], wh_ref[...],
                 preferred_element_type=jnp.float32) + bh_ref[...]

    # tO is a multiple of 128, so these lane slices stay tile-aligned.
    scale = jax.nn.sigmoid(st[:, :tO])       # scale head
    log_theta = jax.nn.sigmoid(st[:, tO:])   # theta head (sigmoid, as in torch)

    # Elementwise epilogue (all f32); exp/sigmoid exps go to the EUP slot.
    rate_ref[...] = scale * lib_ref[...]     # (tB,tO) * (tB,1) lane broadcast
    theta_ref[...] = jnp.exp(log_theta)


def _pick_tile_o(O, H_pad, tB, L_pad):
    """Largest O-tile (lanes, multiple of 128) that keeps VMEM comfortably low."""
    budget = 24 * 1024 * 1024  # conservative vs 32 MiB scoped default (v6e/v7x)
    for tO in (1024, 512, 256, 128):
        if O < tO and tO != 128:
            continue
        t = _round_up(min(O, tO), 128)
        vmem = (
            2 * (H_pad * 2 * t * 2)          # fused head weights, x2 buffers, bf16
            + 2 * (2 * t * 4)                # fused head biases
            + 2 * 2 * (tB * t * 4)           # rate + theta out tiles, x2 buffers
            + 2 * (tB * L_pad * 2)           # z tile
            + 2 * (tB * 128 * 4)             # library tile (lane-padded)
            + 2 * (L_pad * H_pad * 2)        # W1
            + 2 * (H_pad * 4)                # b1
            + tB * H_pad * 2                 # h scratch
        )
        if vmem <= budget:
            return t
    return 128


def decoder_forward(z, library, params, *, weight_dtype=jnp.bfloat16):
    """Fused decoder forward pass. Intended to be called under jax.jit.

    z:       (B, latent_dims) float32
    library: (B, 1) float32
    params:  dict with PyTorch-convention Linear params:
             w1 (H, L), b1 (H,), w_scale (O, H), b_scale (O,),
             w_theta (O, H), b_theta (O,)
    """
    B, L = z.shape
    H = params["w1"].shape[0]
    O = params["w_scale"].shape[0]
    f32 = jnp.float32

    # ---- tile sizing --------------------------------------------------------
    tB = min(128, _round_up(B, 8))
    B_pad = _round_up(B, tB)
    L_pad = _round_up(L, 8)
    H_pad = _round_up(H, 128)
    tO = _pick_tile_o(O, H_pad, tB, L_pad)
    O_pad = _round_up(O, tO)
    nB, nO = B_pad // tB, O_pad // tO

    # ---- pad + transpose weights to (in, out); cast MXU operands to bf16 ----
    # (In production, hoist this packing out of the per-call path.)
    w1 = jnp.pad(params["w1"].T, ((0, L_pad - L), (0, H_pad - H))).astype(weight_dtype)
    b1 = jnp.pad(params["b1"], (0, H_pad - H)).reshape(1, H_pad).astype(f32)

    ws = jnp.pad(params["w_scale"].T, ((0, H_pad - H), (0, O_pad - O)))
    wt = jnp.pad(params["w_theta"].T, ((0, H_pad - H), (0, O_pad - O)))
    bs = jnp.pad(params["b_scale"], (0, O_pad - O))
    bt = jnp.pad(params["b_theta"], (0, O_pad - O))

    # Interleave the two heads at O-tile granularity so one BlockSpec tile of
    # shape (H_pad, 2*tO) holds [ws_tile_j | wt_tile_j].
    wh = jnp.stack([ws.reshape(H_pad, nO, tO), wt.reshape(H_pad, nO, tO)], axis=2)
    wh = wh.reshape(H_pad, nO * 2 * tO).astype(weight_dtype)
    bh = jnp.stack([bs.reshape(nO, tO), bt.reshape(nO, tO)], axis=1)
    bh = bh.reshape(1, nO * 2 * tO).astype(f32)

    # ---- pad activations ----------------------------------------------------
    z_p = jnp.pad(z, ((0, B_pad - B), (0, L_pad - L))).astype(weight_dtype)
    lib_p = jnp.pad(library, ((0, B_pad - B), (0, 0))).astype(f32)

    # ---- cost estimate (advisory) -------------------------------------------
    flops = 2 * B_pad * (L_pad * H_pad + H_pad * 2 * O_pad)
    transcendentals = 3 * B_pad * O_pad
    bytes_accessed = (z_p.size * 2 + lib_p.size * 4 + w1.size * 2 + b1.size * 4
                      + wh.size * 2 + bh.size * 4 + 2 * B_pad * O_pad * 4)

    grid_spec = pltpu.PrefetchScalarGridSpec(
        num_scalar_prefetch=0,
        grid=(nB, nO),
        in_specs=[
            pl.BlockSpec((tB, L_pad), lambda i, j: (i, 0)),      # z: resident per B-tile
            pl.BlockSpec((tB, 1), lambda i, j: (i, 0)),          # library
            pl.BlockSpec((L_pad, H_pad), lambda i, j: (0, 0)),   # W1: resident
            pl.BlockSpec((1, H_pad), lambda i, j: (0, 0)),       # b1: resident
            pl.BlockSpec((H_pad, 2 * tO), lambda i, j: (0, j)),  # fused head weights
            pl.BlockSpec((1, 2 * tO), lambda i, j: (0, j)),      # fused head biases
        ],
        out_specs=(
            pl.BlockSpec((tB, tO), lambda i, j: (i, j)),         # rate
            pl.BlockSpec((tB, tO), lambda i, j: (i, j)),         # theta
        ),
        scratch_shapes=[pltpu.VMEM((tB, H_pad), weight_dtype)],  # h, persists over O-tiles
    )

    rate_p, theta_p = pl.pallas_call(
        _decoder_kernel,
        out_shape=(
            jax.ShapeDtypeStruct((B_pad, O_pad), f32),
            jax.ShapeDtypeStruct((B_pad, O_pad), f32),
        ),
        grid_spec=grid_spec,
        compiler_params=pltpu.CompilerParams(
            # B-tiles shard across v7x's 2 TensorCores; the O axis must stay
            # "arbitrary" (in-order) because the h scratch is filled at j == 0.
            dimension_semantics=("parallel", "arbitrary")),
        cost_estimate=pl.CostEstimate(flops=flops,
                                      transcendentals=transcendentals,
                                      bytes_accessed=bytes_accessed),
    )(z_p, lib_p, w1, b1, wh, bh)

    # Slice off padded rows/columns (padded lanes hold exp(sigmoid(0)) garbage).
    return rate_p[:B, :O], theta_p[:B, :O]


def _init_params(key, output_size, hidden_dims, latent_dims):
    """Deterministic synthetic init (uniform, Kaiming-like bound as nn.Linear)."""
    def linear(k, out_f, in_f):
        kw, kb = jax.random.split(k)
        bound = 1.0 / jnp.sqrt(in_f)
        w = jax.random.uniform(kw, (out_f, in_f), jnp.float32, -bound, bound)
        b = jax.random.uniform(kb, (out_f,), jnp.float32, -bound, bound)
        return w, b

    k1, k2, k3 = jax.random.split(key, 3)
    w1, b1 = linear(k1, hidden_dims, latent_dims)
    ws, bs = linear(k2, output_size, hidden_dims)
    wt, bt = linear(k3, output_size, hidden_dims)
    return dict(w1=w1, b1=b1, w_scale=ws, b_scale=bs, w_theta=wt, b_theta=bt)


def _reference(z, library, p):
    """Pure-JAX (f32) reference for correctness check."""
    h = jax.nn.relu(z @ p["w1"].T + p["b1"])
    scale = jax.nn.sigmoid(h @ p["w_scale"].T + p["b_scale"])
    log_theta = jax.nn.sigmoid(h @ p["w_theta"].T + p["b_theta"])
    return scale * library, jnp.exp(log_theta)


if __name__ == "__main__":
    key = jax.random.PRNGKey(0)
    fwd = jax.jit(decoder_forward)

    def run_case(batch, latent_dims, hidden_dims, output_size, k):
        kz, kl_, kp = jax.random.split(k, 3)
        z = jax.random.normal(kz, (batch, latent_dims), jnp.float32)
        library = jnp.exp(jax.random.normal(kl_, (batch, 1), jnp.float32))
        params = _init_params(kp, output_size, hidden_dims, latent_dims)

        rate, theta = fwd(z, library, params)
        jax.block_until_ready((rate, theta))

        rate_ref, theta_ref = _reference(z, library, params)
        assert rate.shape == rate_ref.shape and theta.shape == theta_ref.shape
        # bf16 weights/activations on the MXU -> modest tolerance vs f32 reference.
        assert jnp.allclose(rate, rate_ref, atol=3e-2, rtol=3e-2)
        assert jnp.allclose(theta, theta_ref, atol=3e-2, rtol=3e-2)

    k1, k2 = jax.random.split(key)
    # Small shapes consistent with the module's forward (single grid step).
    run_case(batch=8, latent_dims=16, hidden_dims=32, output_size=64, k=k1)
    # Larger case exercising B/O padding, multi-tile grid, and the h scratch reuse.
    run_case(batch=160, latent_dims=24, hidden_dims=96, output_size=600, k=k2)

    print("KERNEL_OK")
</pallas_src>

<mosaic_0001>
module attributes {stable_mosaic.version = 11 : i64} {
  func.func @_decoder_kernel(%arg0: i32, %arg1: i32, %arg2: memref<8x16xbf16, #tpu.memory_space<vmem>>, %arg3: memref<8x1xf32, #tpu.memory_space<vmem>>, %arg4: memref<16x128xbf16, #tpu.memory_space<vmem>>, %arg5: memref<1x128xf32, #tpu.memory_space<vmem>>, %arg6: memref<128x256xbf16, #tpu.memory_space<vmem>>, %arg7: memref<1x256xf32, #tpu.memory_space<vmem>>, %arg8: memref<8x128xf32, #tpu.memory_space<vmem>>, %arg9: memref<8x128xf32, #tpu.memory_space<vmem>>, %arg10: memref<8x128xbf16, #tpu.memory_space<vmem>>) attributes {dimension_semantics = [#tpu.dimension_semantics<parallel>, #tpu.dimension_semantics<arbitrary>], iteration_bounds = array<i64: 1, 1>, scalar_prefetch = 0 : i64, scratch_operands = 1 : i64, tpu.core_type = #tpu.core_type<tc>, window_params = [{transform_indices = @transform_0, window_bounds = array<i64: 8, 16>}, {transform_indices = @transform_1, window_bounds = array<i64: 8, 1>}, {pipeline_mode = #tpu.pipeline_mode<synchronous>, transform_indices = @transform_2, window_bounds = array<i64: 16, 128>}, {pipeline_mode = #tpu.pipeline_mode<synchronous>, transform_indices = @transform_3, window_bounds = array<i64: 1, 128>}, {transform_indices = @transform_4, window_bounds = array<i64: 128, 256>}, {transform_indices = @transform_5, window_bounds = array<i64: 1, 256>}, {transform_indices = @transform_6, window_bounds = array<i64: 8, 128>}, {transform_indices = @transform_7, window_bounds = array<i64: 8, 128>}]} {
    %c0_i32 = arith.constant 0 : i32
    %0 = arith.cmpi eq, %arg1, %c0_i32 : i32
    %1 = arith.extui %0 : i1 to i32
    %c0_i32_0 = arith.constant 0 : i32
    %2 = arith.cmpi ne, %1, %c0_i32_0 : i32
    scf.if %2 {
      %c0_14 = arith.constant 0 : index
      %c0_15 = arith.constant 0 : index
      %27 = vector.load %arg2[%c0_14, %c0_15] : memref<8x16xbf16, #tpu.memory_space<vmem>>, vector<8x16xbf16>
      %c0_16 = arith.constant 0 : index
      %c0_17 = arith.constant 0 : index
      %28 = vector.load %arg4[%c0_16, %c0_17] : memref<16x128xbf16, #tpu.memory_space<vmem>>, vector<16x128xbf16>
      %cst_18 = arith.constant dense<0.000000e+00> : vector<8x128xf32>
      %29 = tpu.matmul %27, %28, %cst_18 {dimension_numbers = #tpu.dot_dimension_numbers<[1], [0], [0], [1], [0, 0, 1, 1], [], []>} : vector<8x16xbf16>, vector<16x128xbf16>, vector<8x128xf32> -> vector<8x128xf32>
      %c0_19 = arith.constant 0 : index
      %c0_20 = arith.constant 0 : index
      %30 = vector.load %arg5[%c0_19, %c0_20] : memref<1x128xf32, #tpu.memory_space<vmem>>, vector<1x128xf32>
      %31 = vector.broadcast %30 : vector<1x128xf32> to vector<8x128xf32>
      %32 = arith.addf %29, %31 : vector<8x128xf32>
      %cst_21 = arith.constant 0.000000e+00 : f32
      %33 = vector.broadcast %cst_21 : f32 to vector<8x128xf32>
      %34 = arith.maximumf %32, %33 : vector<8x128xf32>
      %35 = arith.truncf %34 : vector<8x128xf32> to vector<8x128xbf16>
      %c0_22 = arith.constant 0 : index
      %c0_23 = arith.constant 0 : index
      %36 = vector.load %arg10[%c0_22, %c0_23] : memref<8x128xbf16, #tpu.memory_space<vmem>>, vector<8x128xbf16>
      tpu.vector_store %arg10[%c0_22, %c0_23], %35 {strides = array<i32>} : memref<8x128xbf16, #tpu.memory_space<vmem>>, vector<8x128xbf16>,
    } else {
    }
    %c0 = arith.constant 0 : index
    %c0_1 = arith.constant 0 : index
    %3 = vector.load %arg10[%c0, %c0_1] : memref<8x128xbf16, #tpu.memory_space<vmem>>, vector<8x128xbf16>
    %c0_2 = arith.constant 0 : index
    %c0_3 = arith.constant 0 : index
    %4 = vector.load %arg6[%c0_2, %c0_3] : memref<128x256xbf16, #tpu.memory_space<vmem>>, vector<128x256xbf16>
    %cst = arith.constant dense<0.000000e+00> : vector<8x256xf32>
    %5 = tpu.matmul %3, %4, %cst {dimension_numbers = #tpu.dot_dimension_numbers<[1], [0], [0], [1], [0, 0, 1, 1], [], []>} : vector<8x128xbf16>, vector<128x256xbf16>, vector<8x256xf32> -> vector<8x256xf32>
    %c0_4 = arith.constant 0 : index
    %c0_5 = arith.constant 0 : index
    %6 = vector.load %arg7[%c0_4, %c0_5] : memref<1x256xf32, #tpu.memory_space<vmem>>, vector<1x256xf32>
    %7 = vector.broadcast %6 : vector<1x256xf32> to vector<8x256xf32>
    %8 = arith.addf %5, %7 : vector<8x256xf32>
    %9 = vector.extract_strided_slice %8 {offsets = [0, 0], sizes = [8, 128], strides = [1, 1]} : vector<8x256xf32> to vector<8x128xf32>
    %10 = arith.negf %9 : vector<8x128xf32>
    %11 = math.exp %10 : vector<8x128xf32>
    %cst_6 = arith.constant 1.000000e+00 : f32
    %12 = vector.broadcast %cst_6 : f32 to vector<8x128xf32>
    %13 = arith.addf %12, %11 : vector<8x128xf32>
    %14 = arith.divf %12, %13 : vector<8x128xf32>
    %15 = vector.extract_strided_slice %8 {offsets = [0, 128], sizes = [8, 128], strides = [1, 1]} : vector<8x256xf32> to vector<8x128xf32>
    %16 = arith.negf %15 : vector<8x128xf32>
    %17 = math.exp %16 : vector<8x128xf32>
    %cst_7 = arith.constant 1.000000e+00 : f32
    %18 = vector.broadcast %cst_7 : f32 to vector<8x128xf32>
    %19 = arith.addf %18, %17 : vector<8x128xf32>
    %20 = arith.divf %18, %19 : vector<8x128xf32>
    %c0_8 = arith.constant 0 : index
    %c0_9 = arith.constant 0 : index
    %21 = vector.load %arg3[%c0_8, %c0_9] : memref<8x1xf32, #tpu.memory_space<vmem>>, vector<8x1xf32>
    %22 = vector.broadcast %21 : vector<8x1xf32> to vector<8x128xf32>
    %23 = arith.mulf %14, %22 : vector<8x128xf32>
    %c0_10 = arith.constant 0 : index
    %c0_11 = arith.constant 0 : index
    %24 = vector.load %arg8[%c0_10, %c0_11] : memref<8x128xf32, #tpu.memory_space<vmem>>, vector<8x128xf32>
    tpu.vector_store %arg8[%c0_10, %c0_11], %23 {strides = array<i32>} : memref<8x128xf32, #tpu.memory_space<vmem>>, vector<8x128xf32>,
    %25 = math.exp %20 : vector<8x128xf32>
    %c0_12 = arith.constant 0 : index
    %c0_13 = arith.constant 0 : index
    %26 = vector.load %arg9[%c0_12, %c0_13] : memref<8x128xf32, #tpu.memory_space<vmem>>, vector<8x128xf32>
    tpu.vector_store %arg9[%c0_12, %c0_13], %25 {strides = array<i32>} : memref<8x128xf32, #tpu.memory_space<vmem>>, vector<8x128xf32>,
    return
  }
  func.func @transform_0(%arg0: i32, %arg1: i32) -> (i32, i32) {
    %c0_i32 = arith.constant 0 : i32
    %c0_i32_0 = arith.constant 0 : i32
    return %arg0, %c0_i32 : i32, i32
  }
  func.func @transform_1(%arg0: i32, %arg1: i32) -> (i32, i32) {
    %c0_i32 = arith.constant 0 : i32
    %c0_i32_0 = arith.constant 0 : i32
    return %arg0, %c0_i32 : i32, i32
  }
  func.func @transform_2(%arg0: i32, %arg1: i32) -> (i32, i32) {
    %c0_i32 = arith.constant 0 : i32
    %c0_i32_0 = arith.constant 0 : i32
    %c0_i32_1 = arith.constant 0 : i32
    return %c0_i32, %c0_i32_0 : i32, i32
  }
  func.func @transform_3(%arg0: i32, %arg1: i32) -> (i32, i32) {
    %c0_i32 = arith.constant 0 : i32
    %c0_i32_0 = arith.constant 0 : i32
    %c0_i32_1 = arith.constant 0 : i32
    return %c0_i32, %c0_i32_0 : i32, i32
  }
  func.func @transform_4(%arg0: i32, %arg1: i32) -> (i32, i32) {
    %c0_i32 = arith.constant 0 : i32
    %c0_i32_0 = arith.constant 0 : i32
    return %c0_i32, %arg1 : i32, i32
  }
  func.func @transform_5(%arg0: i32, %arg1: i32) -> (i32, i32) {
    %c0_i32 = arith.constant 0 : i32
    %c0_i32_0 = arith.constant 0 : i32
    return %c0_i32, %arg1 : i32, i32
  }
  func.func @transform_6(%arg0: i32, %arg1: i32) -> (i32, i32) {
    %c0_i32 = arith.constant 0 : i32
    return %arg0, %arg1 : i32, i32
  }
  func.func @transform_7(%arg0: i32, %arg1: i32) -> (i32, i32) {
    %c0_i32 = arith.constant 0 : i32
    return %arg0, %arg1 : i32, i32
  }
}

</mosaic_0001>

<llo_original>
// kernel: decoder_forward.1
$region0: #{decoder_forward.1}
  #allocation0 [shape = 'u32[]', space=smem, size = 0x4, offset = 0x4, fixed_abs, tag = 'smem constant byte address 0x4 - core index']
  #allocation1 [shape = 'u32[144,128]{1,0:T(1,128)}', space=vmem, size = 0x12000, scoped, tag = 'internal scratch']
  #allocation2 [shape = 'bf16[8,128]{1,0:T(8,128)(2,1)}', space=vmem, size = 0x800, scoped, tag = 'scratch operand']
  %s0 = inlined_call_operand.vmem [shape: bf16[8,16], index: 0, kind: input, shape index: {}]
  %s1 = inlined_call_operand.vmem [shape: f32[8,1], index: 1, kind: input, shape index: {}]
  %s2 = inlined_call_operand.vmem [shape: bf16[16,128], index: 2, kind: input, shape index: {}]
  %s3 = inlined_call_operand.vmem [shape: f32[1,128], index: 3, kind: input, shape index: {}]
  %s4 = inlined_call_operand.vmem [shape: bf16[128,256], index: 4, kind: input, shape index: {}]
  %s5 = inlined_call_operand.vmem [shape: f32[1,256], index: 5, kind: input, shape index: {}]
  %s6 = inlined_call_operand.hbm [shape: f32[8,128], index: 6, kind: output, shape index: {0}]
  %s7 = inlined_call_operand.hbm [shape: f32[8,128], index: 7, kind: output, shape index: {1}]
  %8 = xla_tuple %s6, %s7
  %s9 = sld [smem:[#allocation0]]
  $region46: #{decoder_forward.1} parent=0
    _
  %s11 = ssub.s32 1, %s9
  %s12 = scalar_select 0, %s11, %s9
  $region1: #{decoder_forward.1} parent=0
    #allocation3 [shape = 'u8[4096]{0}', space=vmem, size = 0x1000, scoped, tag = 'output window, operand 0, single buffered']
    #allocation4 [shape = 's32[1]{0}', space=sflag, size = 0x4, scoped, tag = 'scoped memory for decoder_forward.1']
    #allocation5 [shape = 'u8[4096]{0}', space=vmem, size = 0x1000, scoped, tag = 'output window, operand 1, single buffered']
    #allocation6 [shape = 's32[1]{0}', space=sflag, size = 0x4, scoped, tag = 'scoped memory for decoder_forward.1']
    %13 = vsyncpa [#allocation4], 0
    %14 = vsyncpa [#allocation6], 0
    // Predicated region
    $region2: #{decoder_forward.1} parent=1 // pred_check
      _
    $region3: #{decoder_forward.1} parent=1 // pred_check_branch
      %16 = sbr.rel (0) target = $region5
    $region4: #{decoder_forward.1} parent=1 // pred_region
      _
    $region5: #{decoder_forward.1} parent=1 // pred_fallthru
      _
    // Predicated region
    $region6: #{decoder_forward.1} parent=1 // pred_check
      _
    $region7: #{decoder_forward.1} parent=1 // pred_check_branch
      %18 = sbr.rel (0) target = $region9
    $region8: #{decoder_forward.1} parent=1 // pred_region
      _
    $region9: #{decoder_forward.1} parent=1 // pred_fallthru
      _
    // Predicated region
    $region10: #{decoder_forward.1} parent=1 // pred_check
      _
    $region11: #{decoder_forward.1} parent=1 // pred_check_branch
      %20 = sbr.rel (0) target = $region13
    $region12: #{decoder_forward.1} parent=1 // pred_region
      _
    $region13: #{decoder_forward.1} parent=1 // pred_fallthru
      _
    // Predicated region
    $region14: #{decoder_forward.1} parent=1 // pred_check
      _
    $region15: #{decoder_forward.1} parent=1 // pred_check_branch
      %22 = sbr.rel (0) target = $region17
    $region16: #{decoder_forward.1} parent=1 // pred_region
      _
    $region17: #{decoder_forward.1} parent=1 // pred_fallthru
      _
    // Predicated region
    $region18: #{decoder_forward.1} parent=1 // pred_check
      _
    $region19: #{decoder_forward.1} parent=1 // pred_check_branch
      %24 = sbr.rel (0) target = $region21
    $region20: #{decoder_forward.1} parent=1 // pred_region
      _
    $region21: #{decoder_forward.1} parent=1 // pred_fallthru
      _
    // Predicated region
    $region22: #{decoder_forward.1} parent=1 // pred_check
      _
    $region23: #{decoder_forward.1} parent=1 // pred_check_branch
      %26 = sbr.rel (0) target = $region25
    $region24: #{decoder_forward.1} parent=1 // pred_region
      _
    $region25: #{decoder_forward.1} parent=1 // pred_fallthru
      _
    %p28 = scmp.eq.s32.totalorder 0, 0
    // Predicated region
    $region26: #{decoder_forward.1} parent=1 // pred_check
      %p29 = pneg %p28
    $region27: #{decoder_forward.1} parent=1 // pred_check_branch
      %31 = sbr.rel (%p29) target = $region29
    $region28: #{decoder_forward.1} parent=1 // pred_region
      %v32 = vld [vmem:[%s0] sm:$0xf]
      %v33 = vld [vmem:[%s2] sm:$0xf]
      %v34 = vld [vmem:[%s2 + $0x4] sm:$0xf]
      %v35 = vld [vmem:[%s3] sm:$0x1]
      %v37 = vlaneseq
      %v38 = vshrl.u32 %v37, 7
      %v39 = vsub.s32 0, %v38
      %v40 = vrot.slane %v35, %v39
      %v44 = vunpack.c.l.b16 %v33
      %v45 = vunpack.c.l.b16 %v34
      %v46 = vpack.c.b16 %v45, %v44
      %vm48 = vcmask 130048
      %v50 = vsel %vm48, %v32, 0
      %52 = vmatprep.subr.bf16.mxu0 0
      %53 = vmatpush1.bf16.msra.mxu0 0
      %54 = vmatprep.subr.bf16.mxu0 0
      %55 = vmatpush1.bf16.msra.mxu0 0
      %56 = vmatprep.subr.bf16.mxu0 0
      %57 = vmatpush1.bf16.msra.mxu0 0
      %58 = vmatprep.subr.bf16.mxu0 0
      %59 = vmatpush1.bf16.msra.mxu0 0
      %60 = vmatprep.subr.bf16.mxu0 0
      %61 = vmatpush1.bf16.msra.mxu0 0
      %62 = vmatprep.subr.bf16.mxu0 0
      %63 = vmatpush1.bf16.msra.mxu0 0
      %64 = vmatprep.subr.bf16.mxu0 0
      %65 = vmatpush1.bf16.msra.mxu0 0
      %66 = vmatprep.subr.bf16.mxu0 0
      %67 = vmatpush1.bf16.msra.mxu0 %v46
      %68 = vmatprep.subr.bf16.mxu0 0
      %69 = vmatpush2.bf16.msra.mxu0 0
      %70 = vmatprep.subr.bf16.mxu0 0
      %71 = vmatpush2.bf16.msra.mxu0 0
      %72 = vmatprep.subr.bf16.mxu0 0
      %73 = vmatpush2.bf16.msra.mxu0 0
      %74 = vmatprep.subr.bf16.mxu0 0
      %75 = vmatpush2.bf16.msra.mxu0 0
      %76 = vmatprep.subr.bf16.mxu0 0
      %77 = vmatpush2.bf16.msra.mxu0 0
      %78 = vmatprep.subr.bf16.mxu0 0
      %79 = vmatpush2.bf16.msra.mxu0 0
      %80 = vmatprep.subr.bf16.mxu0 0
      %81 = vmatpush2.bf16.msra.mxu0 0
      %82 = vmatprep.subr.bf16.mxu0 0
      %83 = vmatpush2.bf16.msra.mxu0 0
      %84 = vmatprep.mubr.bf16.mxu0 0
      %85 = vmatmul.mubr.bf16.gmra.mxu0 %v50
      %v86 = vpop.f32.mrf.mxu0
      %v87 = vadd.f32 %v40, %v86
      %v88 = vpop.f32.mrf.mxu0
      %v89 = vpop.f32.mrf.mxu0
      %v90 = vpop.f32.mrf.mxu0
      %91 = vdwg.mxu0
      %v92 = vmax.f32 %v87, 0.0
      %v93 = vpack.c.bf16 %v92, %v92
      %94 = vst [vmem:[#allocation2] sm:$0xf] %v93
    $region29: #{decoder_forward.1} parent=1 // pred_fallthru
      _
    %v95 = vld [vmem:[#allocation2] sm:$0xf]
    %v96 = vld [vmem:[%s4] sm:$0xff]
    %v97 = vld [vmem:[%s4 + $0x8] sm:$0xff]
    %v98 = vld [vmem:[%s4 + $0x10] sm:$0xff]
    %v99 = vld [vmem:[%s4 + $0x18] sm:$0xff]
    %v100 = vld [vmem:[%s4 + $0x20] sm:$0xff]
    %v101 = vld [vmem:[%s4 + $0x28] sm:$0xff]
    %v102 = vld [vmem:[%s4 + $0x30] sm:$0xff]
    %v103 = vld [vmem:[%s4 + $0x38] sm:$0xff]
    %v104 = vld [vmem:[%s4 + $0x40] sm:$0xff]
    %v105 = vld [vmem:[%s4 + $0x48] sm:$0xff]
    %v106 = vld [vmem:[%s4 + $0x50] sm:$0xff]
    %v107 = vld [vmem:[%s4 + $0x58] sm:$0xff]
    %v108 = vld [vmem:[%s4 + $0x60] sm:$0xff]
    %v109 = vld [vmem:[%s4 + $0x68] sm:$0xff]
    %v110 = vld [vmem:[%s4 + $0x70] sm:$0xff]
    %v111 = vld [vmem:[%s4 + $0x78] sm:$0xff]
    %v112 = vld [vmem:[%s5] sm:$0x3]
    %v114 = vlaneseq
    %v115 = vshrl.u32 %v114, 7
    %v116 = vsub.s32 0, %v115
    %v117 = vrot.slane %v112, %v116
    %v118 = vlaneseq
    %v119 = vshrl.u32 %v118, 7
    %v120 = vsub.s32 1, %v119
    %v121 = vrot.slane %v112, %v120
    %v140 = vunpack.c.l.b16 %v96
    %v141 = vunpack.c.h.b16 %v96
    %v142 = vunpack.c.l.b16 %v97
    %v143 = vunpack.c.h.b16 %v97
    %v144 = vunpack.c.l.b16 %v98
    %v145 = vunpack.c.h.b16 %v98
    %v146 = vunpack.c.l.b16 %v99
    %v147 = vunpack.c.h.b16 %v99
    %v148 = vunpack.c.l.b16 %v100
    %v149 = vunpack.c.h.b16 %v100
    %v150 = vunpack.c.l.b16 %v101
    %v151 = vunpack.c.h.b16 %v101
    %v152 = vunpack.c.l.b16 %v102
    %v153 = vunpack.c.h.b16 %v102
    %v154 = vunpack.c.l.b16 %v103
    %v155 = vunpack.c.h.b16 %v103
    %v156 = vunpack.c.l.b16 %v104
    %v157 = vunpack.c.h.b16 %v104
    %v158 = vunpack.c.l.b16 %v105
    %v159 = vunpack.c.h.b16 %v105
    %v160 = vunpack.c.l.b16 %v106
    %v161 = vunpack.c.h.b16 %v106
    %v162 = vunpack.c.l.b16 %v107
    %v163 = vunpack.c.h.b16 %v107
    %v164 = vunpack.c.l.b16 %v108
    %v165 = vunpack.c.h.b16 %v108
    %v166 = vunpack.c.l.b16 %v109
    %v167 = vunpack.c.h.b16 %v109
    %v168 = vunpack.c.l.b16 %v110
    %v169 = vunpack.c.h.b16 %v110
    %v170 = vunpack.c.l.b16 %v111
    %v171 = vunpack.c.h.b16 %v111
    %v172 = vpack.c.b16 %v142, %v140
    %v173 = vpack.c.b16 %v143, %v141
    %v174 = vpack.c.b16 %v146, %v144
    %v175 = vpack.c.b16 %v147, %v145
    %v176 = vpack.c.b16 %v150, %v148
    %v177 = vpack.c.b16 %v151, %v149
    %v178 = vpack.c.b16 %v154, %v152
    %v179 = vpack.c.b16 %v155, %v153
    %v180 = vpack.c.b16 %v158, %v156
    %v181 = vpack.c.b16 %v159, %v157
    %v182 = vpack.c.b16 %v162, %v160
    %v183 = vpack.c.b16 %v163, %v161
    %v184 = vpack.c.b16 %v166, %v164
    %v185 = vpack.c.b16 %v167, %v165
    %v186 = vpack.c.b16 %v170, %v168
    %v187 = vpack.c.b16 %v171, %v169
    %204 = vmatprep.subr.bf16.mxu0 %v187
    %205 = vmatpush1.bf16.msra.mxu0 %v186
    %206 = vmatprep.subr.bf16.mxu0 %v185
    %207 = vmatpush1.bf16.msra.mxu0 %v184
    %208 = vmatprep.subr.bf16.mxu0 %v183
    %209 = vmatpush1.bf16.msra.mxu0 %v182
    %210 = vmatprep.subr.bf16.mxu0 %v181
    %211 = vmatpush1.bf16.msra.mxu0 %v180
    %212 = vmatprep.subr.bf16.mxu0 %v179
    %213 = vmatpush1.bf16.msra.mxu0 %v178
    %214 = vmatprep.subr.bf16.mxu0 %v177
    %215 = vmatpush1.bf16.msra.mxu0 %v176
    %216 = vmatprep.subr.bf16.mxu0 %v175
    %217 = vmatpush1.bf16.msra.mxu0 %v174
    %218 = vmatprep.subr.bf16.mxu0 %v173
    %219 = vmatpush1.bf16.msra.mxu0 %v172
    %220 = vmatprep.subr.bf16.mxu0 0
    %221 = vmatpush2.bf16.msra.mxu0 0
    %222 = vmatprep.subr.bf16.mxu0 0
    %223 = vmatpush2.bf16.msra.mxu0 0
    %224 = vmatprep.subr.bf16.mxu0 0
    %225 = vmatpush2.bf16.msra.mxu0 0
    %226 = vmatprep.subr.bf16.mxu0 0
    %227 = vmatpush2.bf16.msra.mxu0 0
    %228 = vmatprep.subr.bf16.mxu0 0
    %229 = vmatpush2.bf16.msra.mxu0 0
    %230 = vmatprep.subr.bf16.mxu0 0
    %231 = vmatpush2.bf16.msra.mxu0 0
    %232 = vmatprep.subr.bf16.mxu0 0
    %233 = vmatpush2.bf16.msra.mxu0 0
    %234 = vmatprep.subr.bf16.mxu0 0
    %235 = vmatpush2.bf16.msra.mxu0 0
    %236 = vmatprep.mubr.bf16.mxu0 0
    %237 = vmatmul.mubr.bf16.gmra.mxu0 %v95
    %v238 = vpop.f32.mrf.mxu0
    %v239 = vadd.f32 %v117, %v238
    %v240 = vpop.f32.mrf.mxu0
    %v241 = vadd.f32 %v121, %v240
    %v242 = vpop.f32.mrf.mxu0
    %v243 = vpop.f32.mrf.mxu0
    %244 = vdwg.mxu0
    %v245 = vxor.u32 %v239, 2147483648
    %v246 = vmul.f32 %v245, 1.442695
    %v247 = vpow.pop %v246
    %v248 = vadd.f32 %v247, 1.0
    %v249 = vrcp.pop %v248
    %v250 = vmul.f32 1.0, %v249
    %v251 = vxor.u32 %v241, 2147483648
    %v252 = vmul.f32 %v251, 1.442695
    %v253 = vpow.pop %v252
    %v254 = vadd.f32 %v253, 1.0
    %v255 = vrcp.pop %v254
    %v256 = vmul.f32 1.0, %v255
    %v257 = vld [vmem:[%s1] sm:$0xff]
    %259 = vset.pattern.permute.xlu0 0
    %260 = vperm.xlu0 %259, %v257
    %v261 = vpop.permute.xlu0 %260
    %v263 = vmul.f32 %v250, %v261
    %264 = vst [vmem:[#allocation3] sm:$0xff] %v263
    %v265 = vmul.f32 %v256, 1.442695
    %v266 = vpow.pop %v265
    %267 = vst [vmem:[#allocation5] sm:$0xff] %v266
    // Predicated region
    $region30: #{decoder_forward.1} parent=1 // pred_check
      _
    $region31: #{decoder_forward.1} parent=1 // pred_check_branch
      %269 = sbr.rel (0) target = $region33
    $region32: #{decoder_forward.1} parent=1 // pred_region
      %s271 = ssub.s32 128, 128
      %272 = vsyncadd [#allocation4], %s271
      %s274 = sshll.u32 [#allocation3], 4
      %s275 = int_to_ptr.vmem [resolvable:$true] %s274
      %277 = dma.vmem_to_hbm [thread:$0]  %s275, 128, %s6, [#allocation4]
    $region33: #{decoder_forward.1} parent=1 // pred_fallthru
      _
    // Predicated region
    $region34: #{decoder_forward.1} parent=1 // pred_check
      _
    $region35: #{decoder_forward.1} parent=1 // pred_check_branch
      %279 = sbr.rel (0) target = $region37
    $region36: #{decoder_forward.1} parent=1 // pred_region
      %s281 = ssub.s32 128, 128
      %282 = vsyncadd [#allocation6], %s281
      %s284 = sshll.u32 [#allocation5], 4
      %s285 = int_to_ptr.vmem [resolvable:$true] %s284
      %287 = dma.vmem_to_hbm [thread:$0]  %s285, 128, %s7, [#allocation6]
    $region37: #{decoder_forward.1} parent=1 // pred_fallthru
      _
    // Predicated region
    $region38: #{decoder_forward.1} parent=1 // pred_check
      _
    $region39: #{decoder_forward.1} parent=1 // pred_check_branch
      %289 = sbr.rel (0) target = $region41
    $region40: #{decoder_forward.1} parent=1 // pred_region
      %290 = dma.done [#allocation4], 128
    $region41: #{decoder_forward.1} parent=1 // pred_fallthru
      _
    // Predicated region
    $region42: #{decoder_forward.1} parent=1 // pred_check
      _
    $region43: #{decoder_forward.1} parent=1 // pred_check_branch
      %292 = sbr.rel (0) target = $region45
    $region44: #{decoder_forward.1} parent=1 // pred_region
      %293 = dma.done [#allocation6], 128
    $region45: #{decoder_forward.1} parent=1 // pred_fallthru
      _
    %294 = vsyncpa [#allocation4], 1
    %295 = vsyncpa [#allocation6], 1

</llo_original>
